<compile_context>
chip_gen: v7x
topology: tpu7x:2x2x1
jax: 0.10.0
libtpu: 0.0.40
codegen_flags: <defaults>
</compile_context>

<pallas_src>
import math

import jax
import jax.numpy as jnp
from jax.experimental import pallas as pl
from jax.experimental.pallas import tpu as pltpu


# ----------------------------------------------------------------------------
# Kernels
# ----------------------------------------------------------------------------
def _full_c_kernel(r_out: int, ow: int, channels: int, out_dtype):
    """Full-channel path.

    x_ref: (r_out*W, 4*C) = (4*r_out*ow, 4*C)  -- lanes are [dw=0|dw=1|dw=2|dw=3]
    o_ref: (r_out*ow, C)
    """

    def kernel(x_ref, o_ref):
        # Width pooling: four contiguous lane slices (whole-vreg selections
        # when C % 128 == 0), each upcast to f32 before the adds.
        acc = x_ref[:, 0:channels].astype(jnp.float32)
        for dw in range(1, 4):
            acc = acc + x_ref[:, dw * channels:(dw + 1) * channels].astype(
                jnp.float32)
        # Height pooling: rows are ordered r = h_local*ow + j, so grouping 4
        # consecutive image rows is a pure leading-dim split (last two dims
        # (ow, C) untouched -> free view when ow % 8 == 0).
        acc = acc.reshape(r_out, 4, ow, channels)
        pooled = jnp.sum(acc, axis=1) * (1.0 / 16.0)
        o_ref[...] = pooled.reshape(r_out * ow, channels).astype(out_dtype)

    return kernel


def _tiled_c_kernel(r_out: int, ow: int, c_tile: int, out_dtype):
    """Channel-tiled fallback path.

    x_ref: (4*r_out*W, c_tile) = (16*r_out*ow, c_tile)
    o_ref: (r_out*ow, c_tile)
    """
    n = 4 * r_out * ow  # rows remaining after width pooling

    def kernel(x_ref, o_ref):
        # Seq index of pixel (h, 4j+dw) is 4*(h*ow + j) + dw -> uniform
        # sublane stride of 4 per dw.  Upcast each slice to f32 before adds.
        c0 = x_ref[pl.ds(0, n, stride=4), :].astype(jnp.float32)
        c1 = x_ref[pl.ds(1, n, stride=4), :].astype(jnp.float32)
        c2 = x_ref[pl.ds(2, n, stride=4), :].astype(jnp.float32)
        c3 = x_ref[pl.ds(3, n, stride=4), :].astype(jnp.float32)
        colsum = (c0 + c1) + (c2 + c3)                    # (n, c_tile) f32
        colsum = colsum.reshape(r_out, 4, ow, c_tile)
        pooled = jnp.sum(colsum, axis=1) * (1.0 / 16.0)
        o_ref[...] = pooled.reshape(r_out * ow, c_tile).astype(out_dtype)

    return kernel


# ----------------------------------------------------------------------------
# Tiling heuristics
# ----------------------------------------------------------------------------
def _default_target_bytes() -> int:
    """Generation-aware per-block HBM/VMEM target for the input block."""
    try:
        kind = jax.devices()[0].device_kind.lower()
    except Exception:  # pragma: no cover - defensive
        kind = ""
    if "v5e" in kind or "v5 lite" in kind or "v5lite" in kind:
        # 16 MiB default scoped VMEM; ~820 GB/s HBM -> 4 MB is already ~5 us
        # of DMA per block, per-step overhead < 10%.
        return 4 * 1024 * 1024
    if "v6" in kind or "v7" in kind:
        # 32 MiB default scoped VMEM (v7x: 64 MiB physical); faster HBM means
        # bigger blocks are needed to amortize the ~0.35 us per-step cost.
        return 8 * 1024 * 1024
    return 4 * 1024 * 1024  # unknown / older generations: stay conservative


def _choose_rows_per_tile(width: int, lanes: int, itemsize: int,
                          target_bytes: int, batch: int,
                          min_parallel_steps: int = 4) -> int:
    """Output image rows per tile.

    Largest divisor of ow = W/4 whose input block fits `target_bytes`, whose
    row counts are sublane-aligned (multiple of 8 or full extent), and which
    still leaves >= `min_parallel_steps` parallel grid steps (so both v7x
    TensorCores stay busy even at batch=1)."""
    ow = width // 4
    full_in_rows = width * ow
    full_out_rows = ow * ow

    def aligned(r: int) -> bool:
        in_rows, out_rows = r * width, r * ow
        in_ok = (in_rows % 8 == 0) or (in_rows == full_in_rows)
        out_ok = (out_rows % 8 == 0) or (out_rows == full_out_rows)
        return in_ok and out_ok

    def in_bytes(r: int) -> int:
        return 4 * r * width * lanes * itemsize

    divisors = [d for d in range(ow, 0, -1) if ow % d == 0]
    for require_steps in (True, False):
        for r in divisors:
            if not aligned(r) or in_bytes(r) > target_bytes:
                continue
            if require_steps and batch * (ow // r) < min_parallel_steps:
                continue
            return r
    # Nothing fits the byte target: take the smallest aligned tile.
    for r in sorted(divisors):
        if aligned(r):
            return r
    return ow  # full image (block dims == full dims is always legal)


# ----------------------------------------------------------------------------
# Public wrapper
# ----------------------------------------------------------------------------
def average_pool_2d(x: jax.Array, *,
                    c_tile: int | None = None,
                    rows_per_tile: int | None = None,
                    target_block_bytes: int | None = None,
                    input_buffer_count: int | None = None) -> jax.Array:
    """Pallas implementation of AveragePool2D.forward.

    x: (B, S, C) with S = W*W and W % 4 == 0.  Returns (B, S//16, C).
    """
    batch, seq_len, channels = x.shape
    width = math.isqrt(seq_len)
    if width * width != seq_len:
        raise ValueError(
            f"Sequence length {seq_len} is not a perfect square. "
            "Cannot reshape to a square image.")
    if width % 4 != 0:
        raise ValueError(f"Width {width} must be divisible by 4.")
    ow = width // 4
    out_seq = ow * ow
    itemsize = jnp.dtype(x.dtype).itemsize

    if target_block_bytes is None:
        target_block_bytes = _default_target_bytes()

    # --- channel tile: prefer full-C (contiguous HBM slabs) ------------------
    if c_tile is None:
        min_full_c_block = 4 * width * channels * itemsize  # one output row
        if channels % 128 != 0 or min_full_c_block <= max(
                target_block_bytes, 8 * 1024 * 1024):
            c_tile = channels
        else:
            c_tile = 128
            for cand in (512, 384, 256):
                if channels % cand == 0:
                    c_tile = cand
                    break
    if channels % c_tile != 0:
        raise ValueError(f"c_tile={c_tile} must divide channels={channels}.")
    if c_tile != channels and c_tile % 128 != 0:
        raise ValueError("Partial channel tiles must be multiples of 128 lanes.")

    # --- row tile -------------------------------------------------------------
    if rows_per_tile is None:
        rows_per_tile = _choose_rows_per_tile(
            width, c_tile, itemsize, target_block_bytes, batch)
    if ow % rows_per_tile != 0:
        raise ValueError(
            f"rows_per_tile={rows_per_tile} must divide output width {ow}.")
    r_out = rows_per_tile
    row_tiles = ow // r_out
    out_rows = r_out * ow           # output seq positions per block

    # --- VMEM budget / cost hint ----------------------------------------------
    in_block_bytes = 4 * r_out * width * c_tile * itemsize
    out_block_bytes = out_rows * c_tile * itemsize
    colsum_bytes = 4 * r_out * ow * c_tile * 4      # f32 width-sum intermediate
    pooled_bytes = out_rows * c_tile * 4            # f32 pooled intermediate
    need = (2 * in_block_bytes + 2 * out_block_bytes
            + colsum_bytes + pooled_bytes + (2 << 20))
    # Double-buffered blocks + f32 temporaries + margin; always >= 32 MiB
    # (safe on every generation's physical VMEM, above v5e's 16 MiB default),
    # capped below v7x's 64 MiB per-TensorCore physical VMEM.
    vmem_limit = int(min(max(32 * 1024 * 1024, 2 * need), 56 * 1024 * 1024))

    cost = pl.CostEstimate(
        flops=x.size,                                # ~15 adds + 1 mul per out
        transcendentals=0,
        bytes_accessed=x.size * itemsize + batch * out_seq * channels * itemsize)

    in_spec_kwargs = {}
    if input_buffer_count is not None:
        # Pipeline-depth sweep knob (pl.Buffered(3) can smooth exposed DMA
        # issue latency once block sizes are fixed).
        in_spec_kwargs["pipeline_mode"] = pl.Buffered(input_buffer_count)

    if c_tile == channels:
        # ---- full-channel, lane-slice path (preferred) -----------------------
        # Metadata-only view: (B, S, C) -> (B, S//4, 4*C), memory order unchanged.
        x_view = x.reshape(batch, seq_len // 4, 4 * channels)
        in_rows = r_out * width      # rows of the (B, S//4, 4C) view per block
        kernel = _full_c_kernel(r_out, ow, channels, x.dtype)
        grid = (batch, row_tiles)
        in_specs = [pl.BlockSpec((pl.Squeezed(), in_rows, 4 * channels),
                                 lambda b, r: (b, r, 0), **in_spec_kwargs)]
        out_specs = pl.BlockSpec((pl.Squeezed(), out_rows, channels),
                                 lambda b, r: (b, r, 0))
        dims = ("parallel", "parallel")
        operands = (x_view,)
    else:
        # ---- channel-tiled fallback path --------------------------------------
        kernel = _tiled_c_kernel(r_out, ow, c_tile, x.dtype)
        in_rows = 4 * r_out * width  # seq positions of (B, S, C) per block
        grid = (batch, row_tiles, channels // c_tile)
        in_specs = [pl.BlockSpec((pl.Squeezed(), in_rows, c_tile),
                                 lambda b, r, c: (b, r, c), **in_spec_kwargs)]
        out_specs = pl.BlockSpec((pl.Squeezed(), out_rows, c_tile),
                                 lambda b, r, c: (b, r, c))
        dims = ("parallel", "parallel", "parallel")
        operands = (x,)

    return pl.pallas_call(
        kernel,
        out_shape=jax.ShapeDtypeStruct((batch, out_seq, channels), x.dtype),
        grid_spec=pltpu.PrefetchScalarGridSpec(
            num_scalar_prefetch=0,
            grid=grid,
            in_specs=in_specs,
            out_specs=out_specs,
        ),
        compiler_params=pltpu.CompilerParams(
            dimension_semantics=dims,
            vmem_limit_bytes=vmem_limit,
        ),
        cost_estimate=cost,
    )(*operands)


def average_pool_2d_ref(x: jax.Array) -> jax.Array:
    """Plain-JAX reference matching the PyTorch module exactly."""
    batch, seq_len, channels = x.shape
    width = math.isqrt(seq_len)
    xr = jnp.transpose(x, (0, 2, 1)).reshape(batch, channels, width, width)
    xr = xr.reshape(batch, channels, width // 4, 4, width // 4, 4)
    pooled = jnp.mean(xr.astype(jnp.float32), axis=(3, 5)).astype(x.dtype)
    out = pooled.reshape(batch, channels, -1)
    return jnp.transpose(out, (0, 2, 1))                  # (B, out_seq, C)


if __name__ == "__main__":
    key = jax.random.PRNGKey(0)
    # Small shapes consistent with the module: B=2, W=16 (S=256), C=256.
    B, W, C = 2, 16, 256
    S = W * W
    x = jax.random.normal(key, (B, S, C), dtype=jnp.float32)
    ref = average_pool_2d_ref(x)

    # 1) Auto path: full-channel, lane-slice kernel (realistic SigLIP path).
    out_auto = jax.block_until_ready(average_pool_2d(x))
    # 2) Explicit channel-tiled fallback path (stride-4 sublane pooling).
    out_tiled = jax.block_until_ready(
        average_pool_2d(x, c_tile=128, rows_per_tile=2))
    # 3) bf16 input on the full-channel path (packed dtype, f32 accumulation).
    xb = x.astype(jnp.bfloat16)
    out_bf16 = jax.block_until_ready(average_pool_2d(xb))
    ref_bf16 = average_pool_2d_ref(xb)

    assert out_auto.shape == (B, S // 16, C), out_auto.shape
    assert out_tiled.shape == (B, S // 16, C), out_tiled.shape
    assert jnp.allclose(out_auto, ref, atol=1e-5, rtol=1e-5), "full-C mismatch"
    assert jnp.allclose(out_tiled, ref, atol=1e-5, rtol=1e-5), "tiled mismatch"
    assert jnp.allclose(out_bf16.astype(jnp.float32),
                        ref_bf16.astype(jnp.float32),
                        atol=2e-2, rtol=2e-2), "bf16 mismatch"

    print("KERNEL_OK")
</pallas_src>

<mosaic_0001>
module attributes {stable_mosaic.version = 11 : i64} {
  func.func @kernel(%arg0: i32, %arg1: i32, %arg2: memref<1x32x1024xf32, #tpu.memory_space<vmem>>, %arg3: memref<1x8x256xf32, #tpu.memory_space<vmem>>) attributes {dimension_semantics = [#tpu.dimension_semantics<parallel>, #tpu.dimension_semantics<parallel>], iteration_bounds = array<i64: 2, 2>, scalar_prefetch = 0 : i64, scratch_operands = 0 : i64, tpu.core_type = #tpu.core_type<tc>, window_params = [{transform_indices = @transform_0, window_bounds = array<i64: 1, 32, 1024>}, {transform_indices = @transform_1, window_bounds = array<i64: 1, 8, 256>}]} {
    %c0 = arith.constant 0 : index
    %c0_0 = arith.constant 0 : index
    %c0_1 = arith.constant 0 : index
    %0 = vector.load %arg2[%c0, %c0_0, %c0_1] : memref<1x32x1024xf32, #tpu.memory_space<vmem>>, vector<1x32x256xf32>
    %1 = vector.shape_cast %0 : vector<1x32x256xf32> to vector<32x256xf32>
    %c0_2 = arith.constant 0 : index
    %c0_3 = arith.constant 0 : index
    %c256 = arith.constant 256 : index
    %2 = vector.load %arg2[%c0_2, %c0_3, %c256] : memref<1x32x1024xf32, #tpu.memory_space<vmem>>, vector<1x32x256xf32>
    %3 = vector.shape_cast %2 : vector<1x32x256xf32> to vector<32x256xf32>
    %4 = arith.addf %1, %3 : vector<32x256xf32>
    %c0_4 = arith.constant 0 : index
    %c0_5 = arith.constant 0 : index
    %c512 = arith.constant 512 : index
    %5 = vector.load %arg2[%c0_4, %c0_5, %c512] : memref<1x32x1024xf32, #tpu.memory_space<vmem>>, vector<1x32x256xf32>
    %6 = vector.shape_cast %5 : vector<1x32x256xf32> to vector<32x256xf32>
    %7 = arith.addf %4, %6 : vector<32x256xf32>
    %c0_6 = arith.constant 0 : index
    %c0_7 = arith.constant 0 : index
    %c768 = arith.constant 768 : index
    %8 = vector.load %arg2[%c0_6, %c0_7, %c768] : memref<1x32x1024xf32, #tpu.memory_space<vmem>>, vector<1x32x256xf32>
    %9 = vector.shape_cast %8 : vector<1x32x256xf32> to vector<32x256xf32>
    %10 = arith.addf %7, %9 : vector<32x256xf32>
    %11 = vector.shape_cast %10 : vector<32x256xf32> to vector<2x4x4x256xf32>
    %cst = arith.constant dense<0.000000e+00> : vector<2x4x256xf32>
    %12 = vector.multi_reduction <add>, %11, %cst [1] : vector<2x4x4x256xf32> to vector<2x4x256xf32>
    %cst_8 = arith.constant 6.250000e-02 : f32
    %13 = vector.broadcast %cst_8 : f32 to vector<2x4x256xf32>
    %14 = arith.mulf %12, %13 : vector<2x4x256xf32>
    %15 = vector.shape_cast %14 : vector<2x4x256xf32> to vector<8x256xf32>
    %c0_9 = arith.constant 0 : index
    %c0_10 = arith.constant 0 : index
    %c0_11 = arith.constant 0 : index
    %16 = vector.load %arg3[%c0_9, %c0_10, %c0_11] : memref<1x8x256xf32, #tpu.memory_space<vmem>>, vector<1x8x256xf32>
    %17 = vector.shape_cast %16 : vector<1x8x256xf32> to vector<8x256xf32>
    %18 = vector.shape_cast %15 : vector<8x256xf32> to vector<1x8x256xf32>
    tpu.vector_store %arg3[%c0_9, %c0_10, %c0_11], %18 {strides = array<i32>} : memref<1x8x256xf32, #tpu.memory_space<vmem>>, vector<1x8x256xf32>,
    return
  }
  func.func @transform_0(%arg0: i32, %arg1: i32) -> (i32, i32, i32) {
    %c0_i32 = arith.constant 0 : i32
    %c0_i32_0 = arith.constant 0 : i32
    return %arg0, %arg1, %c0_i32 : i32, i32, i32
  }
  func.func @transform_1(%arg0: i32, %arg1: i32) -> (i32, i32, i32) {
    %c0_i32 = arith.constant 0 : i32
    %c0_i32_0 = arith.constant 0 : i32
    return %arg0, %arg1, %c0_i32 : i32, i32, i32
  }
}

</mosaic_0001>

<llo_original>
// kernel: tpu_custom_call.1
$region0: #{tpu_custom_call.1}
  #allocation0 [shape = 'u32[]', space=smem, size = 0x4, offset = 0x4, fixed_abs, tag = 'smem constant byte address 0x4 - core index']
  #allocation1 [shape = 'u32[144,128]{1,0:T(1,128)}', space=vmem, size = 0x12000, scoped, tag = 'internal scratch']
  %s0 = inlined_call_operand.hbm [shape: f32[2,64,1024], index: 0, kind: input, shape index: {}]
  %s1 = inlined_call_operand.hbm [shape: f32[2,16,256], index: 1, kind: output, shape index: {}]
  %s2 = sld [smem:[#allocation0]]
  $region41: #{tpu_custom_call.1} parent=0
    _
  %s4 = ssub.s32 1, %s2
  %s5 = scalar_select 0, %s4, %s2
  $region1: #{tpu_custom_call.1} parent=0
    #allocation2 [shape = 'u8[262144]{0}', space=vmem, size = 0x40000, scoped, tag = 'input window, operand 0']
    #allocation3 [shape = 's32[2]{0}', space=sflag, size = 0x8, scoped, tag = 'scoped memory for tpu_custom_call.1']
    #allocation4 [shape = 's32[2]{0}', space=sflag, size = 0x8, scoped, tag = 'scoped memory for tpu_custom_call.1']
    #allocation5 [shape = 'u8[16384]{0}', space=vmem, size = 0x4000, scoped, tag = 'output window, operand 0']
    %6 = vsyncpa [#allocation3], 0
    %s7 = scalar_lea.sflag [#allocation3], 1
    %8 = vsyncpa %s7, 0
    %9 = vsyncpa [#allocation4], 0
    %s10 = scalar_lea.sflag [#allocation4], 1
    %11 = vsyncpa %s10, 0
    loop: start=0, step=1, limit=6
    $region2: #{tpu_custom_call.1} parent=1 // loop_pre_header
      _
    $region3: #{tpu_custom_call.1} parent=1 // loop_header
      %s13 = sphi 0, %s17
      %p14 = scmp.ge.s32.totalorder %s13, 6
      %s20 = sphi 0, %s32
      %s21 = sphi 0, %s28
      %s22 = sphi 0, %s20
      %s23 = sphi 0, %s21
      %s24 = sphi 0, %s22
      %s25 = sphi 0, %s23
      %s37 = sphi 0, %s39
      %s40 = sphi 0, %s37
      %s41 = sphi 0, %s40
      %s57 = sphi 0, %s41
      %s65 = sphi 0, %s67
      %s68 = sphi 0, %s65
      %s69 = sphi 0, %s68
      %s85 = sphi 0, %s69
    $region4: #{tpu_custom_call.1} parent=1 // loop_header_branch
      %16 = sbr.rel (%p14) target = $region8
    $region5: #{tpu_custom_call.1} parent=1 // loop_body
      %s18 = ssub.s32 %s13, 1
      %s19 = ssub.s32 %s13, 2
      %s26 = sadd.s32 1, %s21
      %p27 = scmp.ge.s32.totalorder %s26, 2
      %s28 = scalar_select %p27, 0, %s26
      %s29 = sadd.s32 1, %s20
      %s30 = scalar_select %p27, %s29, %s20
      %p31 = scmp.ge.s32.totalorder %s30, 2
      %s32 = scalar_select %p31, 0, %s30
      %s33 = ssub.s32 %s20, %s32
      %s34 = ssub.s32 %s21, %s28
      %s35 = sor.u32 %s33, %s34
      %p36 = scmp.eq.s32.totalorder %s35, 0
      %s38 = sadd.s32 %s37, 1
      %s39 = scalar_select %p36, %s37, %s38
      %p42 = pneg %p36
      %p43 = scmp.eq.s32.totalorder %s13, 3
      %p44 = por %p42, %p43
      %p45 = scmp.ne.s32.totalorder %s37, %s40
      %p46 = scmp.eq.s32.totalorder %s13, 0
      %p47 = por %p45, %p46
      %p48 = scmp.ne.s32.totalorder %s37, %s40
      %p49 = scmp.eq.s32.totalorder %s18, 3
      %p50 = por %p48, %p49
      %p51 = scmp.ne.s32.totalorder %s40, %s41
      %p52 = scmp.eq.s32.totalorder %s18, 0
      %p53 = por %p51, %p52
      %p54 = scmp.ne.s32.totalorder %s40, %s41
      %p55 = scmp.eq.s32.totalorder %s19, 3
      %p56 = por %p54, %p55
      %p58 = scmp.ne.s32.totalorder %s41, %s57
      %p59 = scmp.eq.s32.totalorder %s19, 0
      %p60 = por %p58, %p59
      %s61 = ssub.s32 %s20, %s32
      %s62 = ssub.s32 %s21, %s28
      %s63 = sor.u32 %s61, %s62
      %p64 = scmp.eq.s32.totalorder %s63, 0
      %s66 = sadd.s32 %s65, 1
      %s67 = scalar_select %p64, %s65, %s66
      %p70 = pneg %p64
      %p71 = scmp.eq.s32.totalorder %s13, 3
      %p72 = por %p70, %p71
      %p73 = scmp.ne.s32.totalorder %s65, %s68
      %p74 = scmp.eq.s32.totalorder %s13, 0
      %p75 = por %p73, %p74
      %p76 = scmp.ne.s32.totalorder %s65, %s68
      %p77 = scmp.eq.s32.totalorder %s18, 3
      %p78 = por %p76, %p77
      %p79 = scmp.ne.s32.totalorder %s68, %s69
      %p80 = scmp.eq.s32.totalorder %s18, 0
      %p81 = por %p79, %p80
      %p82 = scmp.ne.s32.totalorder %s68, %s69
      %p83 = scmp.eq.s32.totalorder %s19, 3
      %p84 = por %p82, %p83
      %p86 = scmp.ne.s32.totalorder %s69, %s85
      %p87 = scmp.eq.s32.totalorder %s19, 0
      %p88 = por %p86, %p87
      %p89 = scmp.le.s32.totalorder 1, %s13
      %p90 = scmp.lt.s32.totalorder %s13, 5
      %p91 = pnand %p89, %p90
      %p92 = pneg %p91
      // Predicated region
      $region9: #{tpu_custom_call.1} parent=5 // pred_check
        _
      $region10: #{tpu_custom_call.1} parent=5 // pred_check_branch
        %94 = sbr.rel (%p91) target = $region12
      $region11: #{tpu_custom_call.1} parent=5 // pred_region
        %s95 = ssub.s32 %s13, 1
      $region12: #{tpu_custom_call.1} parent=5 // pred_fallthru
        _
      %p96 = scmp.lt.s32.totalorder %s13, 4
      // Predicated region
      $region13: #{tpu_custom_call.1} parent=5 // pred_check
        %p97 = pneg %p96
      $region14: #{tpu_custom_call.1} parent=5 // pred_check_branch
        %99 = sbr.rel (%p97) target = $region16
      $region15: #{tpu_custom_call.1} parent=5 // pred_region
        // Predicated region
        $region17: #{tpu_custom_call.1} parent=15 // pred_check
          %p100 = pneg %p47
        $region18: #{tpu_custom_call.1} parent=15 // pred_check_branch
          %102 = sbr.rel (%p100) target = $region20
        $region19: #{tpu_custom_call.1} parent=15 // pred_region
          %s103 = sand.u32 %s37, 1
          %s104 = scalar_lea.sflag [#allocation3], %s103
          %s105 = sand.u32 %s37, 1
          %s106 = smul.addr %s105, 256
          %s107 = scalar_lea.vmem [#allocation2], %s106
          %s108 = smul.u32 4, %s21
          %s110 = ssub.s32 4096, 4096
          %111 = vsyncadd %s104, %s110
          %s112 = smul.addr %s108, 8
          %s113 = smul.addr %s20, 64
          %s114 = sadd.s32 %s112, %s113
          %s115 = smul.addr %s114, 128
          %s116 = scalar_lea.hbm %s0, %s115
          %s117 = sshll.u32 %s107, 4
          %s118 = int_to_ptr.vmem [resolvable:$true] %s117
          %123 = dma.hbm_to_vmem [thread:$0]  %s116, 4096, %s118, %s104, 1024, 1024, 64
        $region20: #{tpu_custom_call.1} parent=15 // pred_fallthru
          _
      $region16: #{tpu_custom_call.1} parent=5 // pred_fallthru
        _
      %p124 = scmp.le.s32.totalorder 1, %s13
      %p125 = scmp.lt.s32.totalorder %s13, 5
      %p126 = pnand %p124, %p125
      %p127 = pneg %p126
      // Predicated region
      $region21: #{tpu_custom_call.1} parent=5 // pred_check
        _
      $region22: #{tpu_custom_call.1} parent=5 // pred_check_branch
        %129 = sbr.rel (%p126) target = $region24
      $region23: #{tpu_custom_call.1} parent=5 // pred_region
        %s130 = ssub.s32 %s13, 1
        %s131 = sand.u32 %s40, 1
        %s132 = scalar_lea.sflag [#allocation3], %s131
        %s133 = sand.u32 %s40, 1
        %s134 = smul.addr %s133, 256
        %s135 = scalar_lea.vmem [#allocation2], %s134
        // Predicated region
        $region25: #{tpu_custom_call.1} parent=23 // pred_check
          %p136 = pneg %p53
        $region26: #{tpu_custom_call.1} parent=23 // pred_check_branch
          %138 = sbr.rel (%p136) target = $region28
        $region27: #{tpu_custom_call.1} parent=23 // pred_region
          %139 = dma.done %s132, 4096
        $region28: #{tpu_custom_call.1} parent=23 // pred_fallthru
          _
        %s140 = sand.u32 %s40, 1
        %s141 = scalar_lea.sflag [#allocation3], %s140
        %s142 = sand.u32 %s40, 1
        %s143 = smul.addr %s142, 256
        %s144 = scalar_lea.vmem [#allocation2], %s143
        %p145 = pneg %p53
        %p146 = pneg %p50
        %p147 = pneg %p81
        %p148 = pneg %p78
        %s149 = sand.u32 %s68, 1
        %s150 = scalar_lea.sflag [#allocation4], %s149
        %s151 = sand.u32 %s68, 1
        %s152 = smul.addr %s151, 16
        %s153 = scalar_lea.vmem [#allocation5], %s152
        %s154 = smul.u32 4, %s23
        %v155 = vld [vmem:[%s135] sm:$0xff]
        %v156 = vld [vmem:[%s135 + $0x8] sm:$0xff]
        %v157 = vld [vmem:[%s135 + $0x40] sm:$0xff]
        %v158 = vld [vmem:[%s135 + $0x48] sm:$0xff]
        %v159 = vld [vmem:[%s135 + $0x80] sm:$0xff]
        %v160 = vld [vmem:[%s135 + $0x88] sm:$0xff]
        %v161 = vld [vmem:[%s135 + $0xc0] sm:$0xff]
        %v162 = vld [vmem:[%s135 + $0xc8] sm:$0xff]
        %v163 = vld [vmem:[%s135 + $0x10] sm:$0xff]
        %v164 = vld [vmem:[%s135 + $0x18] sm:$0xff]
        %v165 = vld [vmem:[%s135 + $0x50] sm:$0xff]
        %v166 = vld [vmem:[%s135 + $0x58] sm:$0xff]
        %v167 = vld [vmem:[%s135 + $0x90] sm:$0xff]
        %v168 = vld [vmem:[%s135 + $0x98] sm:$0xff]
        %v169 = vld [vmem:[%s135 + $0xd0] sm:$0xff]
        %v170 = vld [vmem:[%s135 + $0xd8] sm:$0xff]
        %v171 = vadd.f32 %v155, %v163
        %v172 = vadd.f32 %v156, %v164
        %v173 = vadd.f32 %v157, %v165
        %v174 = vadd.f32 %v158, %v166
        %v175 = vadd.f32 %v159, %v167
        %v176 = vadd.f32 %v160, %v168
        %v177 = vadd.f32 %v161, %v169
        %v178 = vadd.f32 %v162, %v170
        %v179 = vld [vmem:[%s135 + $0x20] sm:$0xff]
        %v180 = vld [vmem:[%s135 + $0x28] sm:$0xff]
        %v181 = vld [vmem:[%s135 + $0x60] sm:$0xff]
        %v182 = vld [vmem:[%s135 + $0x68] sm:$0xff]
        %v183 = vld [vmem:[%s135 + $0xa0] sm:$0xff]
        %v184 = vld [vmem:[%s135 + $0xa8] sm:$0xff]
        %v185 = vld [vmem:[%s135 + $0xe0] sm:$0xff]
        %v186 = vld [vmem:[%s135 + $0xe8] sm:$0xff]
        %v187 = vadd.f32 %v171, %v179
        %v188 = vadd.f32 %v172, %v180
        %v189 = vadd.f32 %v173, %v181
        %v190 = vadd.f32 %v174, %v182
        %v191 = vadd.f32 %v175, %v183
        %v192 = vadd.f32 %v176, %v184
        %v193 = vadd.f32 %v177, %v185
        %v194 = vadd.f32 %v178, %v186
        %v195 = vld [vmem:[%s135 + $0x30] sm:$0xff]
        %v196 = vld [vmem:[%s135 + $0x38] sm:$0xff]
        %v197 = vld [vmem:[%s135 + $0x70] sm:$0xff]
        %v198 = vld [vmem:[%s135 + $0x78] sm:$0xff]
        %v199 = vld [vmem:[%s135 + $0xb0] sm:$0xff]
        %v200 = vld [vmem:[%s135 + $0xb8] sm:$0xff]
        %v201 = vld [vmem:[%s135 + $0xf0] sm:$0xff]
        %v202 = vld [vmem:[%s135 + $0xf8] sm:$0xff]
        %v203 = vadd.f32 %v187, %v195
        %v204 = vadd.f32 %v188, %v196
        %v205 = vadd.f32 %v189, %v197
        %v206 = vadd.f32 %v190, %v198
        %v207 = vadd.f32 %v191, %v199
        %v208 = vadd.f32 %v192, %v200
        %v209 = vadd.f32 %v193, %v201
        %v210 = vadd.f32 %v194, %v202
        %v219 = vcombine.low %v203, %v204
        %v220 = vcombine.high %v203, %v204
        %v221 = vcombine.low %v205, %v206
        %v222 = vcombine.high %v205, %v206
        %v223 = vcombine.low %v207, %v208
        %v224 = vcombine.high %v207, %v208
        %v225 = vcombine.low %v209, %v210
        %v226 = vcombine.high %v209, %v210
        %v235 = vcombine.high %v219, %v219
        %v236 = vcombine.high %v220, %v220
        %v237 = vcombine.high %v221, %v221
        %v238 = vcombine.high %v222, %v222
        %v239 = vcombine.high %v223, %v223
        %v240 = vcombine.high %v224, %v224
        %v241 = vcombine.high %v225, %v225
        %v242 = vcombine.high %v226, %v226
        %vm251 = vcmask 1043456
        %v252 = vsel %vm251, %v219, 0.0
        %v253 = vsel %vm251, %v220, 0.0
        %v254 = vadd.f32 %v252, %v253
        %v255 = vsel %vm251, %v221, 0.0
        %v256 = vadd.f32 %v254, %v255
        %v257 = vsel %vm251, %v222, 0.0
        %v258 = vadd.f32 %v256, %v257
        %v259 = vsel %vm251, %v235, 0.0
        %v260 = vsel %vm251, %v236, 0.0
        %v261 = vadd.f32 %v259, %v260
        %v262 = vsel %vm251, %v237, 0.0
        %v263 = vadd.f32 %v261, %v262
        %v264 = vsel %vm251, %v238, 0.0
        %v265 = vadd.f32 %v263, %v264
        %v266 = vsel %vm251, %v223, 0.0
        %v267 = vsel %vm251, %v224, 0.0
        %v268 = vadd.f32 %v266, %v267
        %v269 = vsel %vm251, %v225, 0.0
        %v270 = vadd.f32 %v268, %v269
        %v271 = vsel %vm251, %v226, 0.0
        %v272 = vadd.f32 %v270, %v271
        %v273 = vsel %vm251, %v239, 0.0
        %v274 = vsel %vm251, %v240, 0.0
        %v275 = vadd.f32 %v273, %v274
        %v276 = vsel %vm251, %v241, 0.0
        %v277 = vadd.f32 %v275, %v276
        %v278 = vsel %vm251, %v242, 0.0
        %v279 = vadd.f32 %v277, %v278
        %v280 = vmul.f32 %v258, 0.0625
        %v281 = vmul.f32 %v265, 0.0625
        %v282 = vmul.f32 %v272, 0.0625
        %v283 = vmul.f32 %v279, 0.0625
        %v288 = vcombine.low %v280, %v281
        %v289 = vcombine.low %v282, %v283
        %v290 = vcombine.low %v288, %v289
        %v291 = vcombine.high %v288, %v289
        %294 = vst [vmem:[%s153] sm:$0xff] %v290
        %295 = vst [vmem:[%s153 + $0x8] sm:$0xff] %v291
        %s296 = sand.u32 %s68, 1
        %s297 = scalar_lea.sflag [#allocation4], %s296
        %s298 = sand.u32 %s68, 1
        %s299 = smul.addr %s298, 16
        %s300 = scalar_lea.vmem [#allocation5], %s299
        // Predicated region
        $region29: #{tpu_custom_call.1} parent=23 // pred_check
          %p301 = pneg %p78
        $region30: #{tpu_custom_call.1} parent=23 // pred_check_branch
          %303 = sbr.rel (%p301) target = $region32
        $region31: #{tpu_custom_call.1} parent=23 // pred_region
          %s305 = ssub.s32 256, 256
          %306 = vsyncadd %s297, %s305
          %s307 = smul.addr %s23, 2
          %s308 = smul.addr %s22, 4
          %s309 = sadd.s32 %s307, %s308
          %s310 = smul.addr %s309, 128
          %s311 = scalar_lea.hbm %s1, %s310
          %s313 = sshll.u32 %s300, 4
          %s314 = int_to_ptr.vmem [resolvable:$true] %s313
          %316 = dma.vmem_to_hbm [thread:$0]  %s314, 256, %s311, %s297
        $region32: #{tpu_custom_call.1} parent=23 // pred_fallthru
          _
      $region24: #{tpu_custom_call.1} parent=5 // pred_fallthru
        _
      %p317 = scmp.le.s32.totalorder 2, %s13
      // Predicated region
      $region33: #{tpu_custom_call.1} parent=5 // pred_check
        %p318 = pneg %p317
      $region34: #{tpu_custom_call.1} parent=5 // pred_check_branch
        %320 = sbr.rel (%p318) target = $region36
      $region35: #{tpu_custom_call.1} parent=5 // pred_region
        %s321 = ssub.s32 %s13, 2
        // Predicated region
        $region37: #{tpu_custom_call.1} parent=35 // pred_check
          %p322 = pneg %p84
        $region38: #{tpu_custom_call.1} parent=35 // pred_check_branch
          %324 = sbr.rel (%p322) target = $region40
        $region39: #{tpu_custom_call.1} parent=35 // pred_region
          %s325 = sand.u32 %s69, 1
          %s326 = scalar_lea.sflag [#allocation4], %s325
          %s327 = sand.u32 %s69, 1
          %s328 = smul.addr %s327, 16
          %s329 = scalar_lea.vmem [#allocation5], %s328
          %330 = dma.done %s326, 256
        $region40: #{tpu_custom_call.1} parent=35 // pred_fallthru
          _
      $region36: #{tpu_custom_call.1} parent=5 // pred_fallthru
        _
    $region6: #{tpu_custom_call.1} parent=1 // loop_footer
      %s17 = sadd.s32 1, %s13
    $region7: #{tpu_custom_call.1} parent=1 // loop_footer_branch
      %12 = sbr.rel target = $region3
    $region8: #{tpu_custom_call.1} parent=1 // loop_exit
      _
    %331 = vsyncpa [#allocation3], 1
    %s332 = scalar_lea.sflag [#allocation3], 1
    %333 = vsyncpa %s332, 1
    %334 = vsyncpa [#allocation4], 1
    %s335 = scalar_lea.sflag [#allocation4], 1
    %336 = vsyncpa %s335, 1

</llo_original>
